<compile_context>
chip_gen: v7x
topology: tpu7x:2x2x1
jax: 0.10.0
libtpu: 0.0.40
codegen_flags: <defaults>
</compile_context>

<pallas_src>
import jax
import jax.numpy as jnp
from jax.experimental import pallas as pl
from jax.experimental.pallas import tpu as pltpu

# ----------------------------- model config ---------------------------------
INPUT_SIZE = 256
HIDDEN_SIZES = [128, 64]
N_CLASSES = 10
MAX_FACTORS = 64
FACTOR_TEMPERATURE = 1.0
BN_EPS = 1e-5

H1 = HIDDEN_SIZES[0]          # 128 (lane-aligned)
H2 = HIDDEN_SIZES[1]          # 64
H2_PAD = 128                  # padded hidden-2 width (zeros in cols 64..127)
F_SLOT = 64                   # factor slot in the packed output (== MAX_FACTORS)
C_SLOT = 64                   # class slot in the packed output (10 -> 64)
PACK_W = F_SLOT + C_SLOT      # 128-lane packed output width


def _round_up(x, m):
    return ((x + m - 1) // m) * m


# ------------------------------- kernel -------------------------------------
def _factorized_mlp_kernel(
    x_ref,      # (TILE_B, INPUT_SIZE)  f32   (cast to bf16 in-kernel)
    w1_ref,     # (INPUT_SIZE, H1)      bf16  (BN1 folded)
    b1_ref,     # (1, H1)               f32   (BN1 folded)
    w2_ref,     # (H1, H2_PAD)          bf16  (BN2 folded, zero-padded)
    b2_ref,     # (1, H2_PAD)           f32
    wpack_ref,  # (H2_PAD, PACK_W)      bf16  [fw*gate | (fw*gate)@wc padded]
    bpack_ref,  # (1, PACK_W)           f32   [zeros   | bc padded]
    out_ref,    # out: (TILE_B, PACK_W) f32   [factors | logits]
):
    # Cast after load: rides spare VPU slots, avoids a wrapper-side HBM pass.
    x = x_ref[...].astype(jnp.bfloat16)

    # --- layer 1: Linear(+folded BN) -> ReLU -> Dropout(eval = identity) ---
    h = jnp.dot(x, w1_ref[...], preferred_element_type=jnp.float32) + b1_ref[...]
    h = jnp.maximum(h, 0.0)

    # --- layer 2: Linear(+folded BN) -> ReLU -> Dropout(eval = identity) ---
    h = jnp.dot(h.astype(jnp.bfloat16), w2_ref[...],
                preferred_element_type=jnp.float32) + b2_ref[...]
    h = jnp.maximum(h, 0.0)

    # --- packed head: one matmul produces [selected_factors | logits] ---
    #   cols [0:F_SLOT)       = h @ (factor_weights * gate)          (factors)
    #   cols [F_SLOT:PACK_W)  = h @ ((fw*gate) @ wc) + bc            (logits)
    out_ref[...] = (
        jnp.dot(h.astype(jnp.bfloat16), wpack_ref[...],
                preferred_element_type=jnp.float32)
        + bpack_ref[...]
    )


# --------------------------- parameter preparation ---------------------------
def prepare_params(p):
    """Fold BN, gate and classifier into the linear weights; pad & cast."""
    # BatchNorm1d (eval): y = x*scale + shift, applied after Linear -> fold in.
    w1 = p["w1"] * p["bn1_scale"]
    b1 = p["b1"] * p["bn1_scale"] + p["bn1_shift"]
    w2 = p["w2"] * p["bn2_scale"]
    b2 = p["b2"] * p["bn2_scale"] + p["bn2_shift"]

    # gate is input-independent: fold sigmoid(gate/T) into factor_weights cols.
    gate = jax.nn.sigmoid(p["factor_gate"] / FACTOR_TEMPERATURE)   # (1, MAX_FACTORS)
    fw = p["factor_weights"] * gate                                # (H2, MAX_FACTORS)
    # Fold classifier through the gated projection (in f32):
    w_head = fw @ p["wc"]                                          # (H2, N_CLASSES)

    def pad2(a, rows, cols):
        return jnp.pad(a, ((0, rows - a.shape[0]), (0, cols - a.shape[1])))

    w2p = pad2(w2, H1, H2_PAD)
    b2p = pad2(b2, 1, H2_PAD)

    # Packed head weight / bias: one lane-dense 128-col block.
    fw_pad = pad2(fw, H2_PAD, F_SLOT)          # (128, 64)
    wh_pad = pad2(w_head, H2_PAD, C_SLOT)      # (128, 64)
    wpack = jnp.concatenate([fw_pad, wh_pad], axis=1)              # (128, 128)
    bpack = jnp.concatenate([jnp.zeros((1, F_SLOT), jnp.float32),
                             pad2(p["bc"], 1, C_SLOT)], axis=1)    # (1, 128)

    return dict(
        w1=w1.astype(jnp.bfloat16), b1=b1.astype(jnp.float32),
        w2=w2p.astype(jnp.bfloat16), b2=b2p.astype(jnp.float32),
        wpack=wpack.astype(jnp.bfloat16), bpack=bpack.astype(jnp.float32),
    )


# ------------------------------- wrapper -------------------------------------
@jax.jit
def factorized_mlp_forward(x, prep):
    """x: (B, ...) — trailing dims flattened to INPUT_SIZE. prep = prepare_params(params)."""
    if x.ndim > 2:
        x = x.reshape(x.shape[0], -1)
    B = x.shape[0]

    # Batch tile: ~half the batch (so the "parallel" grid has >= 2 steps and
    # v7x's two TensorCores both get work), rounded to the 8-sublane multiple,
    # capped at 2048 rows (~5 MiB per step incl. double-buffering -> fits the
    # 16/32 MiB default scoped VMEM on v5e/v6e/v7x without raising limits).
    half = -(-B // 2)
    tile_b = max(8, min(2048, _round_up(half, 8)))
    b_pad = _round_up(B, tile_b)

    xk = x.astype(jnp.float32)
    if b_pad != B:
        xk = jnp.pad(xk, ((0, b_pad - B), (0, 0)))

    grid = (b_pad // tile_b,)

    # Weights: constant index_map -> VMEM-resident across grid steps.
    const = lambda i: (0, 0)
    in_specs = [
        pl.BlockSpec((tile_b, INPUT_SIZE), lambda i: (i, 0)),   # x (batch-tiled)
        pl.BlockSpec((INPUT_SIZE, H1), const),                  # w1
        pl.BlockSpec((1, H1), const),                           # b1
        pl.BlockSpec((H1, H2_PAD), const),                      # w2
        pl.BlockSpec((1, H2_PAD), const),                       # b2
        pl.BlockSpec((H2_PAD, PACK_W), const),                  # wpack
        pl.BlockSpec((1, PACK_W), const),                       # bpack
    ]
    out_specs = pl.BlockSpec((tile_b, PACK_W), lambda i: (i, 0))

    packed = pl.pallas_call(
        _factorized_mlp_kernel,
        grid=grid,
        in_specs=in_specs,
        out_specs=out_specs,
        out_shape=jax.ShapeDtypeStruct((b_pad, PACK_W), jnp.float32),
        compiler_params=pltpu.CompilerParams(
            dimension_semantics=("parallel",),
        ),
    )(xk, prep["w1"], prep["b1"], prep["w2"], prep["b2"],
      prep["wpack"], prep["bpack"])

    # Unpack: cols [0:64) = selected_factors, cols [64:74) = logits.
    selected_factors = packed[:B, :MAX_FACTORS]
    logits = packed[:B, F_SLOT:F_SLOT + N_CLASSES]
    return logits, selected_factors


# --------------------------- parameter creation ------------------------------
def init_params(key):
    keys = jax.random.split(key, 8)
    h1, h2 = HIDDEN_SIZES

    def linear_init(kw, kb, fan_in, fan_out):
        # kaiming-uniform-ish deterministic init; stored as (in, out)
        bound = 1.0 / jnp.sqrt(fan_in)
        w = jax.random.uniform(kw, (fan_in, fan_out), jnp.float32, -bound, bound)
        b = jax.random.uniform(kb, (1, fan_out), jnp.float32, -bound, bound)
        return w, b

    w1, b1 = linear_init(keys[0], keys[1], INPUT_SIZE, h1)
    w2, b2 = linear_init(keys[2], keys[3], h1, h2)
    wc, bc = linear_init(keys[4], keys[5], MAX_FACTORS, N_CLASSES)

    # BatchNorm1d default state: mean=0, var=1, gamma=1, beta=0
    # scale = gamma/sqrt(var+eps), shift = beta - mean*scale
    bn1_scale = jnp.full((1, h1), 1.0 / jnp.sqrt(1.0 + BN_EPS), jnp.float32)
    bn1_shift = jnp.zeros((1, h1), jnp.float32)
    bn2_scale = jnp.full((1, h2), 1.0 / jnp.sqrt(1.0 + BN_EPS), jnp.float32)
    bn2_shift = jnp.zeros((1, h2), jnp.float32)

    factor_weights = jax.random.normal(keys[6], (h2, MAX_FACTORS), jnp.float32) * 0.01
    factor_gate = jnp.zeros((1, MAX_FACTORS), jnp.float32)

    return dict(
        w1=w1, b1=b1, bn1_scale=bn1_scale, bn1_shift=bn1_shift,
        w2=w2, b2=b2, bn2_scale=bn2_scale, bn2_shift=bn2_shift,
        factor_weights=factor_weights, factor_gate=factor_gate,
        wc=wc, bc=bc,
    )


# --------------------------- pure-JAX reference ------------------------------
def reference_forward(x, p):
    """Full-f32 reference matching the PyTorch eval-mode forward."""
    if x.ndim > 2:
        x = x.reshape(x.shape[0], -1)
    h = jnp.maximum((x @ p["w1"] + p["b1"]) * p["bn1_scale"] + p["bn1_shift"], 0.0)
    h = jnp.maximum((h @ p["w2"] + p["b2"]) * p["bn2_scale"] + p["bn2_shift"], 0.0)
    factors = h @ p["factor_weights"]
    gate = jax.nn.sigmoid(p["factor_gate"] / FACTOR_TEMPERATURE)
    selected = factors * gate
    logits = selected @ p["wc"] + p["bc"]
    return logits, selected


# ---------------------------------- main -------------------------------------
if __name__ == "__main__":
    key = jax.random.PRNGKey(0)
    k_param, k_x = jax.random.split(key)

    params = init_params(k_param)
    prep = prepare_params(params)

    # Example input: batch=8, "image"-like (1, 16, 16) = 256 features, flattened in forward.
    x = jax.random.normal(k_x, (8, 1, 16, 16), jnp.float32)

    logits, selected_factors = factorized_mlp_forward(x, prep)
    jax.block_until_ready((logits, selected_factors))

    ref_logits, ref_factors = reference_forward(x, params)
    assert logits.shape == (8, N_CLASSES)
    assert selected_factors.shape == (8, MAX_FACTORS)
    # bf16 matmul operands -> relaxed tolerance vs the f32 reference.
    assert jnp.allclose(logits, ref_logits, atol=3e-2, rtol=3e-2)
    assert jnp.allclose(selected_factors, ref_factors, atol=3e-2, rtol=3e-2)

    print("KERNEL_OK")
</pallas_src>

<mosaic_0001>
module attributes {stable_mosaic.version = 11 : i64} {
  func.func @_factorized_mlp_kernel(%arg0: i32, %arg1: memref<8x256xf32, #tpu.memory_space<vmem>>, %arg2: memref<256x128xbf16, #tpu.memory_space<vmem>>, %arg3: memref<1x128xf32, #tpu.memory_space<vmem>>, %arg4: memref<128x128xbf16, #tpu.memory_space<vmem>>, %arg5: memref<1x128xf32, #tpu.memory_space<vmem>>, %arg6: memref<128x128xbf16, #tpu.memory_space<vmem>>, %arg7: memref<1x128xf32, #tpu.memory_space<vmem>>, %arg8: memref<8x128xf32, #tpu.memory_space<vmem>>) attributes {dimension_semantics = [#tpu.dimension_semantics<parallel>], iteration_bounds = array<i64: 1>, scalar_prefetch = 0 : i64, scratch_operands = 0 : i64, tpu.core_type = #tpu.core_type<tc>, window_params = [{transform_indices = @transform_0, window_bounds = array<i64: 8, 256>}, {pipeline_mode = #tpu.pipeline_mode<synchronous>, transform_indices = @transform_1, window_bounds = array<i64: 256, 128>}, {pipeline_mode = #tpu.pipeline_mode<synchronous>, transform_indices = @transform_2, window_bounds = array<i64: 1, 128>}, {pipeline_mode = #tpu.pipeline_mode<synchronous>, transform_indices = @transform_3, window_bounds = array<i64: 128, 128>}, {pipeline_mode = #tpu.pipeline_mode<synchronous>, transform_indices = @transform_4, window_bounds = array<i64: 1, 128>}, {pipeline_mode = #tpu.pipeline_mode<synchronous>, transform_indices = @transform_5, window_bounds = array<i64: 128, 128>}, {pipeline_mode = #tpu.pipeline_mode<synchronous>, transform_indices = @transform_6, window_bounds = array<i64: 1, 128>}, {transform_indices = @transform_7, window_bounds = array<i64: 8, 128>}]} {
    %c0 = arith.constant 0 : index
    %c0_0 = arith.constant 0 : index
    %0 = vector.load %arg1[%c0, %c0_0] : memref<8x256xf32, #tpu.memory_space<vmem>>, vector<8x256xf32>
    %1 = arith.truncf %0 : vector<8x256xf32> to vector<8x256xbf16>
    %c0_1 = arith.constant 0 : index
    %c0_2 = arith.constant 0 : index
    %2 = vector.load %arg2[%c0_1, %c0_2] : memref<256x128xbf16, #tpu.memory_space<vmem>>, vector<256x128xbf16>
    %cst = arith.constant dense<0.000000e+00> : vector<8x128xf32>
    %3 = tpu.matmul %1, %2, %cst {dimension_numbers = #tpu.dot_dimension_numbers<[1], [0], [0], [1], [0, 0, 1, 1], [], []>} : vector<8x256xbf16>, vector<256x128xbf16>, vector<8x128xf32> -> vector<8x128xf32>
    %c0_3 = arith.constant 0 : index
    %c0_4 = arith.constant 0 : index
    %4 = vector.load %arg3[%c0_3, %c0_4] : memref<1x128xf32, #tpu.memory_space<vmem>>, vector<1x128xf32>
    %5 = vector.broadcast %4 : vector<1x128xf32> to vector<8x128xf32>
    %6 = arith.addf %3, %5 : vector<8x128xf32>
    %cst_5 = arith.constant 0.000000e+00 : f32
    %7 = vector.broadcast %cst_5 : f32 to vector<8x128xf32>
    %8 = arith.maximumf %6, %7 : vector<8x128xf32>
    %9 = arith.truncf %8 : vector<8x128xf32> to vector<8x128xbf16>
    %c0_6 = arith.constant 0 : index
    %c0_7 = arith.constant 0 : index
    %10 = vector.load %arg4[%c0_6, %c0_7] : memref<128x128xbf16, #tpu.memory_space<vmem>>, vector<128x128xbf16>
    %cst_8 = arith.constant dense<0.000000e+00> : vector<8x128xf32>
    %11 = tpu.matmul %9, %10, %cst_8 {dimension_numbers = #tpu.dot_dimension_numbers<[1], [0], [0], [1], [0, 0, 1, 1], [], []>} : vector<8x128xbf16>, vector<128x128xbf16>, vector<8x128xf32> -> vector<8x128xf32>
    %c0_9 = arith.constant 0 : index
    %c0_10 = arith.constant 0 : index
    %12 = vector.load %arg5[%c0_9, %c0_10] : memref<1x128xf32, #tpu.memory_space<vmem>>, vector<1x128xf32>
    %13 = vector.broadcast %12 : vector<1x128xf32> to vector<8x128xf32>
    %14 = arith.addf %11, %13 : vector<8x128xf32>
    %cst_11 = arith.constant 0.000000e+00 : f32
    %15 = vector.broadcast %cst_11 : f32 to vector<8x128xf32>
    %16 = arith.maximumf %14, %15 : vector<8x128xf32>
    %17 = arith.truncf %16 : vector<8x128xf32> to vector<8x128xbf16>
    %c0_12 = arith.constant 0 : index
    %c0_13 = arith.constant 0 : index
    %18 = vector.load %arg6[%c0_12, %c0_13] : memref<128x128xbf16, #tpu.memory_space<vmem>>, vector<128x128xbf16>
    %cst_14 = arith.constant dense<0.000000e+00> : vector<8x128xf32>
    %19 = tpu.matmul %17, %18, %cst_14 {dimension_numbers = #tpu.dot_dimension_numbers<[1], [0], [0], [1], [0, 0, 1, 1], [], []>} : vector<8x128xbf16>, vector<128x128xbf16>, vector<8x128xf32> -> vector<8x128xf32>
    %c0_15 = arith.constant 0 : index
    %c0_16 = arith.constant 0 : index
    %20 = vector.load %arg7[%c0_15, %c0_16] : memref<1x128xf32, #tpu.memory_space<vmem>>, vector<1x128xf32>
    %21 = vector.broadcast %20 : vector<1x128xf32> to vector<8x128xf32>
    %22 = arith.addf %19, %21 : vector<8x128xf32>
    %c0_17 = arith.constant 0 : index
    %c0_18 = arith.constant 0 : index
    %23 = vector.load %arg8[%c0_17, %c0_18] : memref<8x128xf32, #tpu.memory_space<vmem>>, vector<8x128xf32>
    tpu.vector_store %arg8[%c0_17, %c0_18], %22 {strides = array<i32>} : memref<8x128xf32, #tpu.memory_space<vmem>>, vector<8x128xf32>,
    return
  }
  func.func @transform_0(%arg0: i32) -> (i32, i32) {
    %c0_i32 = arith.constant 0 : i32
    %c0_i32_0 = arith.constant 0 : i32
    return %arg0, %c0_i32 : i32, i32
  }
  func.func @transform_1(%arg0: i32) -> (i32, i32) {
    %c0_i32 = arith.constant 0 : i32
    %c0_i32_0 = arith.constant 0 : i32
    %c0_i32_1 = arith.constant 0 : i32
    return %c0_i32, %c0_i32_0 : i32, i32
  }
  func.func @transform_2(%arg0: i32) -> (i32, i32) {
    %c0_i32 = arith.constant 0 : i32
    %c0_i32_0 = arith.constant 0 : i32
    %c0_i32_1 = arith.constant 0 : i32
    return %c0_i32, %c0_i32_0 : i32, i32
  }
  func.func @transform_3(%arg0: i32) -> (i32, i32) {
    %c0_i32 = arith.constant 0 : i32
    %c0_i32_0 = arith.constant 0 : i32
    %c0_i32_1 = arith.constant 0 : i32
    return %c0_i32, %c0_i32_0 : i32, i32
  }
  func.func @transform_4(%arg0: i32) -> (i32, i32) {
    %c0_i32 = arith.constant 0 : i32
    %c0_i32_0 = arith.constant 0 : i32
    %c0_i32_1 = arith.constant 0 : i32
    return %c0_i32, %c0_i32_0 : i32, i32
  }
  func.func @transform_5(%arg0: i32) -> (i32, i32) {
    %c0_i32 = arith.constant 0 : i32
    %c0_i32_0 = arith.constant 0 : i32
    %c0_i32_1 = arith.constant 0 : i32
    return %c0_i32, %c0_i32_0 : i32, i32
  }
  func.func @transform_6(%arg0: i32) -> (i32, i32) {
    %c0_i32 = arith.constant 0 : i32
    %c0_i32_0 = arith.constant 0 : i32
    %c0_i32_1 = arith.constant 0 : i32
    return %c0_i32, %c0_i32_0 : i32, i32
  }
  func.func @transform_7(%arg0: i32) -> (i32, i32) {
    %c0_i32 = arith.constant 0 : i32
    %c0_i32_0 = arith.constant 0 : i32
    return %arg0, %c0_i32 : i32, i32
  }
}

</mosaic_0001>

<llo_original>
// kernel: factorized_mlp_forward.1
$region0: #{factorized_mlp_forward.1}
  #allocation0 [shape = 'u32[]', space=smem, size = 0x4, offset = 0x4, fixed_abs, tag = 'smem constant byte address 0x4 - core index']
  #allocation1 [shape = 'u32[144,128]{1,0:T(1,128)}', space=vmem, size = 0x12000, scoped, tag = 'internal scratch']
  %s0 = inlined_call_operand.vmem [shape: f32[8,256], index: 0, kind: input, shape index: {}]
  %s1 = inlined_call_operand.vmem [shape: bf16[256,128], index: 1, kind: input, shape index: {}]
  %s2 = inlined_call_operand.vmem [shape: f32[1,128], index: 2, kind: input, shape index: {}]
  %s3 = inlined_call_operand.hbm [shape: bf16[128,128], index: 3, kind: input, shape index: {}]
  %s4 = inlined_call_operand.vmem [shape: f32[1,128], index: 4, kind: input, shape index: {}]
  %s5 = inlined_call_operand.hbm [shape: bf16[128,128], index: 5, kind: input, shape index: {}]
  %s6 = inlined_call_operand.vmem [shape: f32[1,128], index: 6, kind: input, shape index: {}]
  %s7 = inlined_call_operand.vmem [shape: f32[8,128], index: 7, kind: output, shape index: {}]
  %s8 = sld [smem:[#allocation0]]
  $region46: #{factorized_mlp_forward.1} parent=0
    _
  %s10 = ssub.s32 1, %s8
  %s11 = scalar_select 0, %s10, %s8
  $region1: #{factorized_mlp_forward.1} parent=0
    #allocation2 [shape = 'u8[32768]{0}', space=vmem, size = 0x8000, scoped, tag = 'input window, operand 3, single buffered']
    #allocation3 [shape = 's32[1]{0}', space=sflag, size = 0x4, scoped, tag = 'scoped memory for factorized_mlp_forward.1']
    #allocation4 [shape = 'u8[32768]{0}', space=vmem, size = 0x8000, scoped, tag = 'input window, operand 5, single buffered']
    #allocation5 [shape = 's32[1]{0}', space=sflag, size = 0x4, scoped, tag = 'scoped memory for factorized_mlp_forward.1']
    %12 = vsyncpa [#allocation3], 0
    %13 = vsyncpa [#allocation5], 0
    // Predicated region
    $region2: #{factorized_mlp_forward.1} parent=1 // pred_check
      _
    $region3: #{factorized_mlp_forward.1} parent=1 // pred_check_branch
      %15 = sbr.rel (0) target = $region5
    $region4: #{factorized_mlp_forward.1} parent=1 // pred_region
      _
    $region5: #{factorized_mlp_forward.1} parent=1 // pred_fallthru
      _
    // Predicated region
    $region6: #{factorized_mlp_forward.1} parent=1 // pred_check
      _
    $region7: #{factorized_mlp_forward.1} parent=1 // pred_check_branch
      %17 = sbr.rel (0) target = $region9
    $region8: #{factorized_mlp_forward.1} parent=1 // pred_region
      _
    $region9: #{factorized_mlp_forward.1} parent=1 // pred_fallthru
      _
    // Predicated region
    $region10: #{factorized_mlp_forward.1} parent=1 // pred_check
      _
    $region11: #{factorized_mlp_forward.1} parent=1 // pred_check_branch
      %19 = sbr.rel (0) target = $region13
    $region12: #{factorized_mlp_forward.1} parent=1 // pred_region
      _
    $region13: #{factorized_mlp_forward.1} parent=1 // pred_fallthru
      _
    // Predicated region
    $region14: #{factorized_mlp_forward.1} parent=1 // pred_check
      _
    $region15: #{factorized_mlp_forward.1} parent=1 // pred_check_branch
      %21 = sbr.rel (0) target = $region17
    $region16: #{factorized_mlp_forward.1} parent=1 // pred_region
      %s23 = ssub.s32 1024, 1024
      %24 = vsyncadd [#allocation3], %s23
      %s25 = sshll.u32 [#allocation2], 4
      %s26 = int_to_ptr.vmem [resolvable:$true] %s25
      %31 = dma.hbm_to_vmem [thread:$0]  %s3, 1024, %s26, [#allocation3], 64, 64, 4
    $region17: #{factorized_mlp_forward.1} parent=1 // pred_fallthru
      _
    // Predicated region
    $region18: #{factorized_mlp_forward.1} parent=1 // pred_check
      _
    $region19: #{factorized_mlp_forward.1} parent=1 // pred_check_branch
      %33 = sbr.rel (0) target = $region21
    $region20: #{factorized_mlp_forward.1} parent=1 // pred_region
      _
    $region21: #{factorized_mlp_forward.1} parent=1 // pred_fallthru
      _
    // Predicated region
    $region22: #{factorized_mlp_forward.1} parent=1 // pred_check
      _
    $region23: #{factorized_mlp_forward.1} parent=1 // pred_check_branch
      %35 = sbr.rel (0) target = $region25
    $region24: #{factorized_mlp_forward.1} parent=1 // pred_region
      %s37 = ssub.s32 1024, 1024
      %38 = vsyncadd [#allocation5], %s37
      %s39 = sshll.u32 [#allocation4], 4
      %s40 = int_to_ptr.vmem [resolvable:$true] %s39
      %45 = dma.hbm_to_vmem [thread:$0]  %s5, 1024, %s40, [#allocation5], 64, 64, 4
    $region25: #{factorized_mlp_forward.1} parent=1 // pred_fallthru
      _
    // Predicated region
    $region26: #{factorized_mlp_forward.1} parent=1 // pred_check
      _
    $region27: #{factorized_mlp_forward.1} parent=1 // pred_check_branch
      %47 = sbr.rel (0) target = $region29
    $region28: #{factorized_mlp_forward.1} parent=1 // pred_region
      _
    $region29: #{factorized_mlp_forward.1} parent=1 // pred_fallthru
      _
    // Predicated region
    $region30: #{factorized_mlp_forward.1} parent=1 // pred_check
      _
    $region31: #{factorized_mlp_forward.1} parent=1 // pred_check_branch
      %49 = sbr.rel (0) target = $region33
    $region32: #{factorized_mlp_forward.1} parent=1 // pred_region
      %50 = dma.done [#allocation3], 1024
    $region33: #{factorized_mlp_forward.1} parent=1 // pred_fallthru
      _
    // Predicated region
    $region34: #{factorized_mlp_forward.1} parent=1 // pred_check
      _
    $region35: #{factorized_mlp_forward.1} parent=1 // pred_check_branch
      %52 = sbr.rel (0) target = $region37
    $region36: #{factorized_mlp_forward.1} parent=1 // pred_region
      %53 = dma.done [#allocation5], 1024
    $region37: #{factorized_mlp_forward.1} parent=1 // pred_fallthru
      _
    %v55 = vld [vmem:[%s0] sm:$0xff]
    %v56 = vld [vmem:[%s0 + $0x8] sm:$0xff]
    %v57 = vpack.c.bf16 %v55, %v55
    %v58 = vpack.c.bf16 %v56, %v56
    %v59 = vld [vmem:[%s1] sm:$0xf]
    %v60 = vld [vmem:[%s1 + $0x4] sm:$0xf]
    %v61 = vld [vmem:[%s1 + $0x8] sm:$0xf]
    %v62 = vld [vmem:[%s1 + $0xc] sm:$0xf]
    %v63 = vld [vmem:[%s1 + $0x10] sm:$0xf]
    %v64 = vld [vmem:[%s1 + $0x14] sm:$0xf]
    %v65 = vld [vmem:[%s1 + $0x18] sm:$0xf]
    %v66 = vld [vmem:[%s1 + $0x1c] sm:$0xf]
    %v67 = vld [vmem:[%s1 + $0x20] sm:$0xf]
    %v68 = vld [vmem:[%s1 + $0x24] sm:$0xf]
    %v69 = vld [vmem:[%s1 + $0x28] sm:$0xf]
    %v70 = vld [vmem:[%s1 + $0x2c] sm:$0xf]
    %v71 = vld [vmem:[%s1 + $0x30] sm:$0xf]
    %v72 = vld [vmem:[%s1 + $0x34] sm:$0xf]
    %v73 = vld [vmem:[%s1 + $0x38] sm:$0xf]
    %v74 = vld [vmem:[%s1 + $0x3c] sm:$0xf]
    %v75 = vld [vmem:[%s1 + $0x40] sm:$0xf]
    %v76 = vld [vmem:[%s1 + $0x44] sm:$0xf]
    %v77 = vld [vmem:[%s1 + $0x48] sm:$0xf]
    %v78 = vld [vmem:[%s1 + $0x4c] sm:$0xf]
    %v79 = vld [vmem:[%s1 + $0x50] sm:$0xf]
    %v80 = vld [vmem:[%s1 + $0x54] sm:$0xf]
    %v81 = vld [vmem:[%s1 + $0x58] sm:$0xf]
    %v82 = vld [vmem:[%s1 + $0x5c] sm:$0xf]
    %v83 = vld [vmem:[%s1 + $0x60] sm:$0xf]
    %v84 = vld [vmem:[%s1 + $0x64] sm:$0xf]
    %v85 = vld [vmem:[%s1 + $0x68] sm:$0xf]
    %v86 = vld [vmem:[%s1 + $0x6c] sm:$0xf]
    %v87 = vld [vmem:[%s1 + $0x70] sm:$0xf]
    %v88 = vld [vmem:[%s1 + $0x74] sm:$0xf]
    %v89 = vld [vmem:[%s1 + $0x78] sm:$0xf]
    %v90 = vld [vmem:[%s1 + $0x7c] sm:$0xf]
    %v91 = vld [vmem:[%s2] sm:$0x1]
    %v93 = vlaneseq
    %v94 = vshrl.u32 %v93, 7
    %v95 = vsub.s32 0, %v94
    %v96 = vrot.slane %v91, %v95
    %v130 = vunpack.c.l.b16 %v59
    %v131 = vunpack.c.l.b16 %v60
    %v132 = vunpack.c.l.b16 %v61
    %v133 = vunpack.c.l.b16 %v62
    %v134 = vunpack.c.l.b16 %v63
    %v135 = vunpack.c.l.b16 %v64
    %v136 = vunpack.c.l.b16 %v65
    %v137 = vunpack.c.l.b16 %v66
    %v138 = vunpack.c.l.b16 %v67
    %v139 = vunpack.c.l.b16 %v68
    %v140 = vunpack.c.l.b16 %v69
    %v141 = vunpack.c.l.b16 %v70
    %v142 = vunpack.c.l.b16 %v71
    %v143 = vunpack.c.l.b16 %v72
    %v144 = vunpack.c.l.b16 %v73
    %v145 = vunpack.c.l.b16 %v74
    %v146 = vunpack.c.l.b16 %v75
    %v147 = vunpack.c.l.b16 %v76
    %v148 = vunpack.c.l.b16 %v77
    %v149 = vunpack.c.l.b16 %v78
    %v150 = vunpack.c.l.b16 %v79
    %v151 = vunpack.c.l.b16 %v80
    %v152 = vunpack.c.l.b16 %v81
    %v153 = vunpack.c.l.b16 %v82
    %v154 = vunpack.c.l.b16 %v83
    %v155 = vunpack.c.l.b16 %v84
    %v156 = vunpack.c.l.b16 %v85
    %v157 = vunpack.c.l.b16 %v86
    %v158 = vunpack.c.l.b16 %v87
    %v159 = vunpack.c.l.b16 %v88
    %v160 = vunpack.c.l.b16 %v89
    %v161 = vunpack.c.l.b16 %v90
    %v162 = vpack.c.b16 %v131, %v130
    %v163 = vpack.c.b16 %v133, %v132
    %v164 = vpack.c.b16 %v135, %v134
    %v165 = vpack.c.b16 %v137, %v136
    %v166 = vpack.c.b16 %v139, %v138
    %v167 = vpack.c.b16 %v141, %v140
    %v168 = vpack.c.b16 %v143, %v142
    %v169 = vpack.c.b16 %v145, %v144
    %v170 = vpack.c.b16 %v147, %v146
    %v171 = vpack.c.b16 %v149, %v148
    %v172 = vpack.c.b16 %v151, %v150
    %v173 = vpack.c.b16 %v153, %v152
    %v174 = vpack.c.b16 %v155, %v154
    %v175 = vpack.c.b16 %v157, %v156
    %v176 = vpack.c.b16 %v159, %v158
    %v177 = vpack.c.b16 %v161, %v160
    %194 = vmatprep.subr.bf16.mxu0 0
    %195 = vmatpush1.bf16.msra.mxu0 %v162
    %196 = vmatprep.subr.bf16.mxu0 0
    %197 = vmatpush1.bf16.msra.mxu0 %v163
    %198 = vmatprep.subr.bf16.mxu0 0
    %199 = vmatpush1.bf16.msra.mxu0 %v164
    %200 = vmatprep.subr.bf16.mxu0 0
    %201 = vmatpush1.bf16.msra.mxu0 %v165
    %202 = vmatprep.subr.bf16.mxu0 0
    %203 = vmatpush1.bf16.msra.mxu0 %v166
    %204 = vmatprep.subr.bf16.mxu0 0
    %205 = vmatpush1.bf16.msra.mxu0 %v167
    %206 = vmatprep.subr.bf16.mxu0 0
    %207 = vmatpush1.bf16.msra.mxu0 %v168
    %208 = vmatprep.subr.bf16.mxu0 0
    %209 = vmatpush1.bf16.msra.mxu0 %v169
    %210 = vmatprep.subr.bf16.mxu0 0
    %211 = vmatpush1.bf16.msra.mxu0 %v170
    %212 = vmatprep.subr.bf16.mxu0 0
    %213 = vmatpush1.bf16.msra.mxu0 %v171
    %214 = vmatprep.subr.bf16.mxu0 0
    %215 = vmatpush1.bf16.msra.mxu0 %v172
    %216 = vmatprep.subr.bf16.mxu0 0
    %217 = vmatpush1.bf16.msra.mxu0 %v173
    %218 = vmatprep.subr.bf16.mxu0 0
    %219 = vmatpush1.bf16.msra.mxu0 %v174
    %220 = vmatprep.subr.bf16.mxu0 0
    %221 = vmatpush1.bf16.msra.mxu0 %v175
    %222 = vmatprep.subr.bf16.mxu0 0
    %223 = vmatpush1.bf16.msra.mxu0 %v176
    %224 = vmatprep.subr.bf16.mxu0 0
    %225 = vmatpush1.bf16.msra.mxu0 %v177
    %226 = vmatprep.mubr.bf16.mxu0 %v58
    %227 = vmatmul.mubr.bf16.gmra.mrb[0].mxu0 %v57
    %v228 = vpop.f32.mrb[0].mxu0
    %v229 = vadd.f32 %v96, %v228
    %v230 = vpop.f32.mrb[0].mxu0
    %v231 = vpop.f32.mrb[0].mxu0
    %v232 = vpop.f32.mrb[0].mxu0
    %233 = vdwg.mxu0
    %v234 = vmax.f32 %v229, 0.0
    %v235 = vpack.c.bf16 %v234, %v234
    %v236 = vld [vmem:[#allocation2] sm:$0xf]
    %v237 = vld [vmem:[#allocation2 + $0x4] sm:$0xf]
    %v238 = vld [vmem:[#allocation2 + $0x8] sm:$0xf]
    %v239 = vld [vmem:[#allocation2 + $0xc] sm:$0xf]
    %v240 = vld [vmem:[#allocation2 + $0x10] sm:$0xf]
    %v241 = vld [vmem:[#allocation2 + $0x14] sm:$0xf]
    %v242 = vld [vmem:[#allocation2 + $0x18] sm:$0xf]
    %v243 = vld [vmem:[#allocation2 + $0x1c] sm:$0xf]
    %v244 = vld [vmem:[#allocation2 + $0x20] sm:$0xf]
    %v245 = vld [vmem:[#allocation2 + $0x24] sm:$0xf]
    %v246 = vld [vmem:[#allocation2 + $0x28] sm:$0xf]
    %v247 = vld [vmem:[#allocation2 + $0x2c] sm:$0xf]
    %v248 = vld [vmem:[#allocation2 + $0x30] sm:$0xf]
    %v249 = vld [vmem:[#allocation2 + $0x34] sm:$0xf]
    %v250 = vld [vmem:[#allocation2 + $0x38] sm:$0xf]
    %v251 = vld [vmem:[#allocation2 + $0x3c] sm:$0xf]
    %v252 = vld [vmem:[%s4] sm:$0x1]
    %v254 = vlaneseq
    %v255 = vshrl.u32 %v254, 7
    %v256 = vsub.s32 0, %v255
    %v257 = vrot.slane %v252, %v256
    %v275 = vunpack.c.l.b16 %v236
    %v276 = vunpack.c.l.b16 %v237
    %v277 = vunpack.c.l.b16 %v238
    %v278 = vunpack.c.l.b16 %v239
    %v279 = vunpack.c.l.b16 %v240
    %v280 = vunpack.c.l.b16 %v241
    %v281 = vunpack.c.l.b16 %v242
    %v282 = vunpack.c.l.b16 %v243
    %v283 = vunpack.c.l.b16 %v244
    %v284 = vunpack.c.l.b16 %v245
    %v285 = vunpack.c.l.b16 %v246
    %v286 = vunpack.c.l.b16 %v247
    %v287 = vunpack.c.l.b16 %v248
    %v288 = vunpack.c.l.b16 %v249
    %v289 = vunpack.c.l.b16 %v250
    %v290 = vunpack.c.l.b16 %v251
    %v291 = vpack.c.b16 %v276, %v275
    %v292 = vpack.c.b16 %v278, %v277
    %v293 = vpack.c.b16 %v280, %v279
    %v294 = vpack.c.b16 %v282, %v281
    %v295 = vpack.c.b16 %v284, %v283
    %v296 = vpack.c.b16 %v286, %v285
    %v297 = vpack.c.b16 %v288, %v287
    %v298 = vpack.c.b16 %v290, %v289
    %307 = vmatprep.subr.bf16.mxu0 0
    %308 = vmatpush1.bf16.msra.mxu0 %v291
    %309 = vmatprep.subr.bf16.mxu0 0
    %310 = vmatpush1.bf16.msra.mxu0 %v292
    %311 = vmatprep.subr.bf16.mxu0 0
    %312 = vmatpush1.bf16.msra.mxu0 %v293
    %313 = vmatprep.subr.bf16.mxu0 0
    %314 = vmatpush1.bf16.msra.mxu0 %v294
    %315 = vmatprep.subr.bf16.mxu0 0
    %316 = vmatpush1.bf16.msra.mxu0 %v295
    %317 = vmatprep.subr.bf16.mxu0 0
    %318 = vmatpush1.bf16.msra.mxu0 %v296
    %319 = vmatprep.subr.bf16.mxu0 0
    %320 = vmatpush1.bf16.msra.mxu0 %v297
    %321 = vmatprep.subr.bf16.mxu0 0
    %322 = vmatpush1.bf16.msra.mxu0 %v298
    %323 = vmatprep.subr.bf16.mxu0 0
    %324 = vmatpush1.bf16.msra.mxu0 0
    %325 = vmatprep.subr.bf16.mxu0 0
    %326 = vmatpush1.bf16.msra.mxu0 0
    %327 = vmatprep.subr.bf16.mxu0 0
    %328 = vmatpush1.bf16.msra.mxu0 0
    %329 = vmatprep.subr.bf16.mxu0 0
    %330 = vmatpush1.bf16.msra.mxu0 0
    %331 = vmatprep.subr.bf16.mxu0 0
    %332 = vmatpush1.bf16.msra.mxu0 0
    %333 = vmatprep.subr.bf16.mxu0 0
    %334 = vmatpush1.bf16.msra.mxu0 0
    %335 = vmatprep.subr.bf16.mxu0 0
    %336 = vmatpush1.bf16.msra.mxu0 0
    %337 = vmatprep.subr.bf16.mxu0 0
    %338 = vmatpush1.bf16.msra.mxu0 0
    %339 = vmatprep.mubr.bf16.mxu0 0
    %340 = vmatmul.mubr.bf16.gmra.mrb[0].mxu0 %v235
    %v341 = vpop.f32.mrb[0].mxu0
    %v342 = vadd.f32 %v257, %v341
    %v343 = vpop.f32.mrb[0].mxu0
    %v344 = vpop.f32.mrb[0].mxu0
    %v345 = vpop.f32.mrb[0].mxu0
    %346 = vdwg.mxu0
    %v347 = vmax.f32 %v342, 0.0
    %v348 = vpack.c.bf16 %v347, %v347
    %v349 = vld [vmem:[#allocation4] sm:$0xf]
    %v350 = vld [vmem:[#allocation4 + $0x4] sm:$0xf]
    %v351 = vld [vmem:[#allocation4 + $0x8] sm:$0xf]
    %v352 = vld [vmem:[#allocation4 + $0xc] sm:$0xf]
    %v353 = vld [vmem:[#allocation4 + $0x10] sm:$0xf]
    %v354 = vld [vmem:[#allocation4 + $0x14] sm:$0xf]
    %v355 = vld [vmem:[#allocation4 + $0x18] sm:$0xf]
    %v356 = vld [vmem:[#allocation4 + $0x1c] sm:$0xf]
    %v357 = vld [vmem:[#allocation4 + $0x20] sm:$0xf]
    %v358 = vld [vmem:[#allocation4 + $0x24] sm:$0xf]
    %v359 = vld [vmem:[#allocation4 + $0x28] sm:$0xf]
    %v360 = vld [vmem:[#allocation4 + $0x2c] sm:$0xf]
    %v361 = vld [vmem:[#allocation4 + $0x30] sm:$0xf]
    %v362 = vld [vmem:[#allocation4 + $0x34] sm:$0xf]
    %v363 = vld [vmem:[#allocation4 + $0x38] sm:$0xf]
    %v364 = vld [vmem:[#allocation4 + $0x3c] sm:$0xf]
    %v365 = vld [vmem:[%s6] sm:$0x1]
    %v367 = vlaneseq
    %v368 = vshrl.u32 %v367, 7
    %v369 = vsub.s32 0, %v368
    %v370 = vrot.slane %v365, %v369
    %v388 = vunpack.c.l.b16 %v349
    %v389 = vunpack.c.l.b16 %v350
    %v390 = vunpack.c.l.b16 %v351
    %v391 = vunpack.c.l.b16 %v352
    %v392 = vunpack.c.l.b16 %v353
    %v393 = vunpack.c.l.b16 %v354
    %v394 = vunpack.c.l.b16 %v355
    %v395 = vunpack.c.l.b16 %v356
    %v396 = vunpack.c.l.b16 %v357
    %v397 = vunpack.c.l.b16 %v358
    %v398 = vunpack.c.l.b16 %v359
    %v399 = vunpack.c.l.b16 %v360
    %v400 = vunpack.c.l.b16 %v361
    %v401 = vunpack.c.l.b16 %v362
    %v402 = vunpack.c.l.b16 %v363
    %v403 = vunpack.c.l.b16 %v364
    %v404 = vpack.c.b16 %v389, %v388
    %v405 = vpack.c.b16 %v391, %v390
    %v406 = vpack.c.b16 %v393, %v392
    %v407 = vpack.c.b16 %v395, %v394
    %v408 = vpack.c.b16 %v397, %v396
    %v409 = vpack.c.b16 %v399, %v398
    %v410 = vpack.c.b16 %v401, %v400
    %v411 = vpack.c.b16 %v403, %v402
    %420 = vmatprep.subr.bf16.mxu0 0
    %421 = vmatpush1.bf16.msra.mxu0 %v404
    %422 = vmatprep.subr.bf16.mxu0 0
    %423 = vmatpush1.bf16.msra.mxu0 %v405
    %424 = vmatprep.subr.bf16.mxu0 0
    %425 = vmatpush1.bf16.msra.mxu0 %v406
    %426 = vmatprep.subr.bf16.mxu0 0
    %427 = vmatpush1.bf16.msra.mxu0 %v407
    %428 = vmatprep.subr.bf16.mxu0 0
    %429 = vmatpush1.bf16.msra.mxu0 %v408
    %430 = vmatprep.subr.bf16.mxu0 0
    %431 = vmatpush1.bf16.msra.mxu0 %v409
    %432 = vmatprep.subr.bf16.mxu0 0
    %433 = vmatpush1.bf16.msra.mxu0 %v410
    %434 = vmatprep.subr.bf16.mxu0 0
    %435 = vmatpush1.bf16.msra.mxu0 %v411
    %436 = vmatprep.subr.bf16.mxu0 0
    %437 = vmatpush1.bf16.msra.mxu0 0
    %438 = vmatprep.subr.bf16.mxu0 0
    %439 = vmatpush1.bf16.msra.mxu0 0
    %440 = vmatprep.subr.bf16.mxu0 0
    %441 = vmatpush1.bf16.msra.mxu0 0
    %442 = vmatprep.subr.bf16.mxu0 0
    %443 = vmatpush1.bf16.msra.mxu0 0
    %444 = vmatprep.subr.bf16.mxu0 0
    %445 = vmatpush1.bf16.msra.mxu0 0
    %446 = vmatprep.subr.bf16.mxu0 0
    %447 = vmatpush1.bf16.msra.mxu0 0
    %448 = vmatprep.subr.bf16.mxu0 0
    %449 = vmatpush1.bf16.msra.mxu0 0
    %450 = vmatprep.subr.bf16.mxu0 0
    %451 = vmatpush1.bf16.msra.mxu0 0
    %452 = vmatprep.mubr.bf16.mxu0 0
    %453 = vmatmul.mubr.bf16.gmra.mrb[0].mxu0 %v348
    %v454 = vpop.f32.mrb[0].mxu0
    %v455 = vadd.f32 %v370, %v454
    %v456 = vpop.f32.mrb[0].mxu0
    %v457 = vpop.f32.mrb[0].mxu0
    %v458 = vpop.f32.mrb[0].mxu0
    %459 = vdwg.mxu0
    %460 = vst [vmem:[%s7] sm:$0xff] %v455
    // Predicated region
    $region38: #{factorized_mlp_forward.1} parent=1 // pred_check
      _
    $region39: #{factorized_mlp_forward.1} parent=1 // pred_check_branch
      %462 = sbr.rel (0) target = $region41
    $region40: #{factorized_mlp_forward.1} parent=1 // pred_region
      _
    $region41: #{factorized_mlp_forward.1} parent=1 // pred_fallthru
      _
    // Predicated region
    $region42: #{factorized_mlp_forward.1} parent=1 // pred_check
      _
    $region43: #{factorized_mlp_forward.1} parent=1 // pred_check_branch
      %464 = sbr.rel (0) target = $region45
    $region44: #{factorized_mlp_forward.1} parent=1 // pred_region
      _
    $region45: #{factorized_mlp_forward.1} parent=1 // pred_fallthru
      _
    %465 = vsyncpa [#allocation3], 1
    %466 = vsyncpa [#allocation5], 1

</llo_original>
